<compile_context>
chip_gen: v7x
topology: tpu7x:2x2x1
jax: 0.10.0
libtpu: 0.0.40
codegen_flags: <defaults>
</compile_context>

<pallas_src>
import functools

import jax
import jax.numpy as jnp
from jax import lax
from jax.experimental import pallas as pl
from jax.experimental.pallas import tpu as pltpu

_LANE = 128


def _round_up(x, m):
    return ((x + m - 1) // m) * m


def _make_kernel(num_mid_layers, vocab_size, compute_dtype):
    """refs = (seq, M_flat, b1, [w_i, b_i] * num_mid_layers, w_out, b_out, out)."""

    def kernel(seq_ref, mflat_ref, b1_ref, *rest):
        out_ref = rest[-1]
        prm = rest[:-1]

        tok = seq_ref[...]                          # (TB, L) int32 tokens
        tb, L = tok.shape
        lv = mflat_ref.shape[0]                     # L * V

        # Build the (TB, L*V) one-hot of the combined index c = t*V + token[b, t]
        # entirely in VMEM (never touches HBM).
        pos = lax.broadcasted_iota(jnp.int32, (tb, L), 1)
        comb = tok + pos * vocab_size               # (TB, L)
        col = lax.broadcasted_iota(jnp.int32, (tb, lv), 1)
        oh = jnp.zeros((tb, lv), jnp.float32)
        for t in range(L):                          # unrolled at trace time, pure VPU
            oh = oh + (col == comb[:, t:t + 1]).astype(jnp.float32)

        # Fused embedding + first Linear:  one_hot @ (emb @ W1) + b1, then ReLU.
        h = jnp.dot(oh.astype(compute_dtype), mflat_ref[...],
                    preferred_element_type=jnp.float32)
        h = jnp.maximum(h + b1_ref[...], 0.0)       # f32 bias add + ReLU

        i = 0
        for _ in range(num_mid_layers):             # remaining hidden Linear + ReLU stack
            w = prm[i][...]
            b = prm[i + 1][...]
            i += 2
            h = jnp.dot(h.astype(compute_dtype), w,
                        preferred_element_type=jnp.float32)
            h = jnp.maximum(h + b, 0.0)

        w_o = prm[i][...]
        b_o = prm[i + 1][...]
        out_ref[...] = (jnp.dot(h.astype(compute_dtype), w_o,
                                preferred_element_type=jnp.float32)
                        + b_o).astype(out_ref.dtype)

    return kernel


def template_matching_mlp_shared_embedding_forward(
        seq, params, *, vocab_size, template_length,
        block_b=128, compute_dtype=jnp.bfloat16):
    """params = {"embedding": (V, H), "linears": [(W, b), ...], "output": (W, b)}.
    W stored as (in, out) (transpose of torch nn.Linear.weight), so y = x @ W + b."""
    emb = params["embedding"].astype(jnp.float32)            # (V, H)
    linears = params["linears"]
    w_out, b_out = params["output"]

    V, H = emb.shape
    L = template_length
    assert V == vocab_size
    batch = seq.shape[0]
    out_dim = w_out.shape[1]

    H_pad = _round_up(max(H, _LANE), _LANE)
    OUT_pad = _round_up(max(out_dim, _LANE), _LANE)

    # --- fold the shared embedding into the first Linear (gather-sum form) ------------
    w1, b1 = linears[0]                                       # (L*H, H), (H,)
    w1_r = w1.astype(jnp.float32).reshape(L, H, H)            # row t*H + j -> (t, j, :)
    m_flat = jnp.einsum('vh,thk->tvk', emb, w1_r).reshape(L * V, H)   # (L*V, H)

    def _pad2(a, rows, cols):
        a = a.astype(jnp.float32)
        return jnp.pad(a, ((0, rows - a.shape[0]), (0, cols - a.shape[1])))

    def _pad_bias(b, cols):
        b = b.astype(jnp.float32)
        return jnp.pad(b, (0, cols - b.shape[0])).reshape(1, cols)

    mats = [jnp.pad(m_flat, ((0, 0), (0, H_pad - H))).astype(compute_dtype)]
    biases = [_pad_bias(b1, H_pad)]
    for w, b in linears[1:]:
        mats.append(_pad2(w, H_pad, H_pad).astype(compute_dtype))
        biases.append(_pad_bias(b, H_pad))
    mats.append(_pad2(w_out, H_pad, OUT_pad).astype(compute_dtype))
    biases.append(_pad_bias(b_out, OUT_pad))

    flat = []
    for w, b in zip(mats, biases):
        flat += [w, b]

    # --- batch tiling ------------------------------------------------------------------
    TB = _round_up(min(block_b, _round_up(batch, 8)), 8)      # f32 sublane multiple
    B_pad = _round_up(batch, TB)
    seq_p = seq.astype(jnp.int32)
    if B_pad != batch:
        seq_p = jnp.pad(seq_p, ((0, B_pad - batch), (0, 0)))  # token 0, rows sliced off
    grid = (B_pad // TB,)

    tile_map = lambda i: (i, 0)
    res_map = lambda i: (0, 0)                                # weights stay VMEM-resident
    in_specs = [pl.BlockSpec((TB, L), tile_map)]
    in_specs += [pl.BlockSpec(a.shape, res_map) for a in flat]
    out_specs = pl.BlockSpec((TB, OUT_pad), tile_map)

    # --- compiler hints ------------------------------------------------------------------
    resident_bytes = sum(a.size * a.dtype.itemsize for a in flat)
    tiled_bytes = 2 * (TB * L * 4 + TB * OUT_pad * 4)         # double-buffered seq + out
    scratch_bytes = TB * (L * V + 6 * H_pad) * 4              # in-kernel temporaries
    vmem_limit = int(resident_bytes + tiled_bytes + scratch_bytes + (4 << 20))

    num_mid = len(linears) - 1
    flops = 2 * B_pad * (L * V * H_pad + num_mid * H_pad * H_pad + H_pad * OUT_pad)
    bytes_accessed = seq_p.size * 4 + B_pad * OUT_pad * 4 + resident_bytes
    cost = pl.CostEstimate(flops=flops, transcendentals=0,
                           bytes_accessed=bytes_accessed)

    kernel = _make_kernel(num_mid, vocab_size, compute_dtype)
    out_padded = pl.pallas_call(
        kernel,
        out_shape=jax.ShapeDtypeStruct((B_pad, OUT_pad), jnp.float32),
        grid=grid,
        in_specs=in_specs,
        out_specs=out_specs,
        compiler_params=pltpu.CompilerParams(
            dimension_semantics=("parallel",),
            vmem_limit_bytes=vmem_limit),
        cost_estimate=cost,
    )(seq_p, *flat)

    return out_padded[:batch, :out_dim]


def init_params(key, vocab_size, template_length, hidden_dim, output_dim, num_layers):
    """PyTorch-default-style init: Embedding ~ N(0,1); Linear W, b ~ U(+-1/sqrt(fan_in)).
    W stored as (in, out)."""
    key, k_emb = jax.random.split(key)
    emb = jax.random.normal(k_emb, (vocab_size, hidden_dim), jnp.float32)

    def linear(k, fan_in, fan_out):
        kw, kb = jax.random.split(k)
        bound = 1.0 / float(fan_in) ** 0.5
        w = jax.random.uniform(kw, (fan_in, fan_out), jnp.float32, -bound, bound)
        b = jax.random.uniform(kb, (fan_out,), jnp.float32, -bound, bound)
        return w, b

    input_dim = hidden_dim * template_length
    dims = [input_dim] + [hidden_dim] * (num_layers - 1)
    linears = []
    for i in range(len(dims) - 1):
        key, k = jax.random.split(key)
        linears.append(linear(k, dims[i], dims[i + 1]))
    key, k = jax.random.split(key)
    output = linear(k, hidden_dim, output_dim)
    return {"embedding": emb, "linears": linears, "output": output}


def reference_forward(seq, params):
    """Plain-JAX f32 reference matching the PyTorch module exactly."""
    emb = params["embedding"]
    x = emb[seq]                                    # (B, L, H) embedding lookup
    x = x.reshape(seq.shape[0], -1)                 # row-major flatten, same as .view
    for w, b in params["linears"]:
        x = jnp.maximum(x @ w + b, 0.0)
    w, b = params["output"]
    return x @ w + b


if __name__ == "__main__":
    vocab_size = 8
    template_length = 8
    hidden_dim = 32
    output_dim = 4
    num_layers = 3          # linears = [Linear(256, 32), Linear(32, 32)], output Linear(32, 4)
    batch = 64

    key = jax.random.PRNGKey(0)
    key, k_seq, k_par = jax.random.split(key, 3)
    seq = jax.random.randint(k_seq, (batch, template_length), 0, vocab_size,
                             dtype=jnp.int32)
    params = init_params(k_par, vocab_size, template_length, hidden_dim,
                         output_dim, num_layers)

    fwd = jax.jit(functools.partial(
        template_matching_mlp_shared_embedding_forward,
        vocab_size=vocab_size, template_length=template_length,
        block_b=16,                      # batch tile -> grid=(4,), pipelined + parallel
        compute_dtype=jnp.bfloat16))     # bf16 MXU operands, f32 accumulation

    out = jax.block_until_ready(fwd(seq, params))
    ref = reference_forward(seq, params)

    assert out.shape == (batch, output_dim)
    max_err = float(jnp.max(jnp.abs(out - ref)))
    assert max_err < 3e-2, f"mismatch vs reference: max abs err {max_err}"

    print("KERNEL_OK")
</pallas_src>

<mosaic_0001>
module attributes {stable_mosaic.version = 11 : i64} {
  func.func @kernel(%arg0: i32, %arg1: memref<16x8xi32, #tpu.memory_space<vmem>>, %arg2: memref<64x128xbf16, #tpu.memory_space<vmem>>, %arg3: memref<1x128xf32, #tpu.memory_space<vmem>>, %arg4: memref<128x128xbf16, #tpu.memory_space<vmem>>, %arg5: memref<1x128xf32, #tpu.memory_space<vmem>>, %arg6: memref<128x128xbf16, #tpu.memory_space<vmem>>, %arg7: memref<1x128xf32, #tpu.memory_space<vmem>>, %arg8: memref<16x128xf32, #tpu.memory_space<vmem>>) attributes {dimension_semantics = [#tpu.dimension_semantics<parallel>], iteration_bounds = array<i64: 4>, scalar_prefetch = 0 : i64, scratch_operands = 0 : i64, tpu.core_type = #tpu.core_type<tc>, window_params = [{transform_indices = @transform_0, window_bounds = array<i64: 16, 8>}, {pipeline_mode = #tpu.pipeline_mode<synchronous>, transform_indices = @transform_1, window_bounds = array<i64: 64, 128>}, {pipeline_mode = #tpu.pipeline_mode<synchronous>, transform_indices = @transform_2, window_bounds = array<i64: 1, 128>}, {pipeline_mode = #tpu.pipeline_mode<synchronous>, transform_indices = @transform_3, window_bounds = array<i64: 128, 128>}, {pipeline_mode = #tpu.pipeline_mode<synchronous>, transform_indices = @transform_4, window_bounds = array<i64: 1, 128>}, {pipeline_mode = #tpu.pipeline_mode<synchronous>, transform_indices = @transform_5, window_bounds = array<i64: 128, 128>}, {pipeline_mode = #tpu.pipeline_mode<synchronous>, transform_indices = @transform_6, window_bounds = array<i64: 1, 128>}, {transform_indices = @transform_7, window_bounds = array<i64: 16, 128>}]} {
    %c0 = arith.constant 0 : index
    %c0_0 = arith.constant 0 : index
    %0 = vector.load %arg1[%c0, %c0_0] : memref<16x8xi32, #tpu.memory_space<vmem>>, vector<16x8xi32>
    %1 = tpu.iota {dimensions = array<i32: 1>} : vector<16x8xi32>
    %c8_i32 = arith.constant 8 : i32
    %2 = vector.broadcast %c8_i32 : i32 to vector<16x8xi32>
    %3 = arith.muli %1, %2 : vector<16x8xi32>
    %4 = arith.addi %0, %3 : vector<16x8xi32>
    %5 = tpu.iota {dimensions = array<i32: 1>} : vector<16x64xi32>
    %cst = arith.constant 0.000000e+00 : f32
    %6 = vector.broadcast %cst : f32 to vector<16x64xf32>
    %7 = vector.extract_strided_slice %4 {offsets = [0, 0], sizes = [16, 1], strides = [1, 1]} : vector<16x8xi32> to vector<16x1xi32>
    %8 = vector.broadcast %7 : vector<16x1xi32> to vector<16x64xi32>
    %9 = arith.cmpi eq, %5, %8 : vector<16x64xi32>
    %10 = arith.extui %9 : vector<16x64xi1> to vector<16x64xi32>
    %11 = arith.sitofp %10 : vector<16x64xi32> to vector<16x64xf32>
    %12 = arith.addf %6, %11 : vector<16x64xf32>
    %13 = vector.extract_strided_slice %4 {offsets = [0, 1], sizes = [16, 1], strides = [1, 1]} : vector<16x8xi32> to vector<16x1xi32>
    %14 = vector.broadcast %13 : vector<16x1xi32> to vector<16x64xi32>
    %15 = arith.cmpi eq, %5, %14 : vector<16x64xi32>
    %16 = arith.extui %15 : vector<16x64xi1> to vector<16x64xi32>
    %17 = arith.sitofp %16 : vector<16x64xi32> to vector<16x64xf32>
    %18 = arith.addf %12, %17 : vector<16x64xf32>
    %19 = vector.extract_strided_slice %4 {offsets = [0, 2], sizes = [16, 1], strides = [1, 1]} : vector<16x8xi32> to vector<16x1xi32>
    %20 = vector.broadcast %19 : vector<16x1xi32> to vector<16x64xi32>
    %21 = arith.cmpi eq, %5, %20 : vector<16x64xi32>
    %22 = arith.extui %21 : vector<16x64xi1> to vector<16x64xi32>
    %23 = arith.sitofp %22 : vector<16x64xi32> to vector<16x64xf32>
    %24 = arith.addf %18, %23 : vector<16x64xf32>
    %25 = vector.extract_strided_slice %4 {offsets = [0, 3], sizes = [16, 1], strides = [1, 1]} : vector<16x8xi32> to vector<16x1xi32>
    %26 = vector.broadcast %25 : vector<16x1xi32> to vector<16x64xi32>
    %27 = arith.cmpi eq, %5, %26 : vector<16x64xi32>
    %28 = arith.extui %27 : vector<16x64xi1> to vector<16x64xi32>
    %29 = arith.sitofp %28 : vector<16x64xi32> to vector<16x64xf32>
    %30 = arith.addf %24, %29 : vector<16x64xf32>
    %31 = vector.extract_strided_slice %4 {offsets = [0, 4], sizes = [16, 1], strides = [1, 1]} : vector<16x8xi32> to vector<16x1xi32>
    %32 = vector.broadcast %31 : vector<16x1xi32> to vector<16x64xi32>
    %33 = arith.cmpi eq, %5, %32 : vector<16x64xi32>
    %34 = arith.extui %33 : vector<16x64xi1> to vector<16x64xi32>
    %35 = arith.sitofp %34 : vector<16x64xi32> to vector<16x64xf32>
    %36 = arith.addf %30, %35 : vector<16x64xf32>
    %37 = vector.extract_strided_slice %4 {offsets = [0, 5], sizes = [16, 1], strides = [1, 1]} : vector<16x8xi32> to vector<16x1xi32>
    %38 = vector.broadcast %37 : vector<16x1xi32> to vector<16x64xi32>
    %39 = arith.cmpi eq, %5, %38 : vector<16x64xi32>
    %40 = arith.extui %39 : vector<16x64xi1> to vector<16x64xi32>
    %41 = arith.sitofp %40 : vector<16x64xi32> to vector<16x64xf32>
    %42 = arith.addf %36, %41 : vector<16x64xf32>
    %43 = vector.extract_strided_slice %4 {offsets = [0, 6], sizes = [16, 1], strides = [1, 1]} : vector<16x8xi32> to vector<16x1xi32>
    %44 = vector.broadcast %43 : vector<16x1xi32> to vector<16x64xi32>
    %45 = arith.cmpi eq, %5, %44 : vector<16x64xi32>
    %46 = arith.extui %45 : vector<16x64xi1> to vector<16x64xi32>
    %47 = arith.sitofp %46 : vector<16x64xi32> to vector<16x64xf32>
    %48 = arith.addf %42, %47 : vector<16x64xf32>
    %49 = vector.extract_strided_slice %4 {offsets = [0, 7], sizes = [16, 1], strides = [1, 1]} : vector<16x8xi32> to vector<16x1xi32>
    %50 = vector.broadcast %49 : vector<16x1xi32> to vector<16x64xi32>
    %51 = arith.cmpi eq, %5, %50 : vector<16x64xi32>
    %52 = arith.extui %51 : vector<16x64xi1> to vector<16x64xi32>
    %53 = arith.sitofp %52 : vector<16x64xi32> to vector<16x64xf32>
    %54 = arith.addf %48, %53 : vector<16x64xf32>
    %55 = arith.truncf %54 : vector<16x64xf32> to vector<16x64xbf16>
    %c0_1 = arith.constant 0 : index
    %c0_2 = arith.constant 0 : index
    %56 = vector.load %arg2[%c0_1, %c0_2] : memref<64x128xbf16, #tpu.memory_space<vmem>>, vector<64x128xbf16>
    %cst_3 = arith.constant dense<0.000000e+00> : vector<16x128xf32>
    %57 = tpu.matmul %55, %56, %cst_3 {dimension_numbers = #tpu.dot_dimension_numbers<[1], [0], [0], [1], [0, 0, 1, 1], [], []>} : vector<16x64xbf16>, vector<64x128xbf16>, vector<16x128xf32> -> vector<16x128xf32>
    %c0_4 = arith.constant 0 : index
    %c0_5 = arith.constant 0 : index
    %58 = vector.load %arg3[%c0_4, %c0_5] : memref<1x128xf32, #tpu.memory_space<vmem>>, vector<1x128xf32>
    %59 = vector.broadcast %58 : vector<1x128xf32> to vector<16x128xf32>
    %60 = arith.addf %57, %59 : vector<16x128xf32>
    %cst_6 = arith.constant 0.000000e+00 : f32
    %61 = vector.broadcast %cst_6 : f32 to vector<16x128xf32>
    %62 = arith.maximumf %60, %61 : vector<16x128xf32>
    %c0_7 = arith.constant 0 : index
    %c0_8 = arith.constant 0 : index
    %63 = vector.load %arg4[%c0_7, %c0_8] : memref<128x128xbf16, #tpu.memory_space<vmem>>, vector<128x128xbf16>
    %c0_9 = arith.constant 0 : index
    %c0_10 = arith.constant 0 : index
    %64 = vector.load %arg5[%c0_9, %c0_10] : memref<1x128xf32, #tpu.memory_space<vmem>>, vector<1x128xf32>
    %65 = arith.truncf %62 : vector<16x128xf32> to vector<16x128xbf16>
    %cst_11 = arith.constant dense<0.000000e+00> : vector<16x128xf32>
    %66 = tpu.matmul %65, %63, %cst_11 {dimension_numbers = #tpu.dot_dimension_numbers<[1], [0], [0], [1], [0, 0, 1, 1], [], []>} : vector<16x128xbf16>, vector<128x128xbf16>, vector<16x128xf32> -> vector<16x128xf32>
    %67 = vector.broadcast %64 : vector<1x128xf32> to vector<16x128xf32>
    %68 = arith.addf %66, %67 : vector<16x128xf32>
    %cst_12 = arith.constant 0.000000e+00 : f32
    %69 = vector.broadcast %cst_12 : f32 to vector<16x128xf32>
    %70 = arith.maximumf %68, %69 : vector<16x128xf32>
    %c0_13 = arith.constant 0 : index
    %c0_14 = arith.constant 0 : index
    %71 = vector.load %arg6[%c0_13, %c0_14] : memref<128x128xbf16, #tpu.memory_space<vmem>>, vector<128x128xbf16>
    %c0_15 = arith.constant 0 : index
    %c0_16 = arith.constant 0 : index
    %72 = vector.load %arg7[%c0_15, %c0_16] : memref<1x128xf32, #tpu.memory_space<vmem>>, vector<1x128xf32>
    %73 = arith.truncf %70 : vector<16x128xf32> to vector<16x128xbf16>
    %cst_17 = arith.constant dense<0.000000e+00> : vector<16x128xf32>
    %74 = tpu.matmul %73, %71, %cst_17 {dimension_numbers = #tpu.dot_dimension_numbers<[1], [0], [0], [1], [0, 0, 1, 1], [], []>} : vector<16x128xbf16>, vector<128x128xbf16>, vector<16x128xf32> -> vector<16x128xf32>
    %75 = vector.broadcast %72 : vector<1x128xf32> to vector<16x128xf32>
    %76 = arith.addf %74, %75 : vector<16x128xf32>
    %c0_18 = arith.constant 0 : index
    %c0_19 = arith.constant 0 : index
    %77 = vector.load %arg8[%c0_18, %c0_19] : memref<16x128xf32, #tpu.memory_space<vmem>>, vector<16x128xf32>
    tpu.vector_store %arg8[%c0_18, %c0_19], %76 {strides = array<i32>} : memref<16x128xf32, #tpu.memory_space<vmem>>, vector<16x128xf32>,
    return
  }
  func.func @transform_0(%arg0: i32) -> (i32, i32) {
    %c0_i32 = arith.constant 0 : i32
    %c0_i32_0 = arith.constant 0 : i32
    return %arg0, %c0_i32 : i32, i32
  }
  func.func @transform_1(%arg0: i32) -> (i32, i32) {
    %c0_i32 = arith.constant 0 : i32
    %c0_i32_0 = arith.constant 0 : i32
    %c0_i32_1 = arith.constant 0 : i32
    return %c0_i32, %c0_i32_0 : i32, i32
  }
  func.func @transform_2(%arg0: i32) -> (i32, i32) {
    %c0_i32 = arith.constant 0 : i32
    %c0_i32_0 = arith.constant 0 : i32
    %c0_i32_1 = arith.constant 0 : i32
    return %c0_i32, %c0_i32_0 : i32, i32
  }
  func.func @transform_3(%arg0: i32) -> (i32, i32) {
    %c0_i32 = arith.constant 0 : i32
    %c0_i32_0 = arith.constant 0 : i32
    %c0_i32_1 = arith.constant 0 : i32
    return %c0_i32, %c0_i32_0 : i32, i32
  }
  func.func @transform_4(%arg0: i32) -> (i32, i32) {
    %c0_i32 = arith.constant 0 : i32
    %c0_i32_0 = arith.constant 0 : i32
    %c0_i32_1 = arith.constant 0 : i32
    return %c0_i32, %c0_i32_0 : i32, i32
  }
  func.func @transform_5(%arg0: i32) -> (i32, i32) {
    %c0_i32 = arith.constant 0 : i32
    %c0_i32_0 = arith.constant 0 : i32
    %c0_i32_1 = arith.constant 0 : i32
    return %c0_i32, %c0_i32_0 : i32, i32
  }
  func.func @transform_6(%arg0: i32) -> (i32, i32) {
    %c0_i32 = arith.constant 0 : i32
    %c0_i32_0 = arith.constant 0 : i32
    %c0_i32_1 = arith.constant 0 : i32
    return %c0_i32, %c0_i32_0 : i32, i32
  }
  func.func @transform_7(%arg0: i32) -> (i32, i32) {
    %c0_i32 = arith.constant 0 : i32
    %c0_i32_0 = arith.constant 0 : i32
    return %arg0, %c0_i32 : i32, i32
  }
}

</mosaic_0001>

<llo_original>
// kernel: template_matching_mlp_shared_embedding_forward.1
$region0: #{template_matching_mlp_shared_embedding_forward.1}
  #allocation0 [shape = 'u32[]', space=smem, size = 0x4, offset = 0x4, fixed_abs, tag = 'smem constant byte address 0x4 - core index']
  #allocation1 [shape = 'u32[144,128]{1,0:T(1,128)}', space=vmem, size = 0x12000, scoped, tag = 'internal scratch']
  %s0 = inlined_call_operand.vmem [shape: s32[64,8], index: 0, kind: input, shape index: {}]
  %s1 = inlined_call_operand.vmem [shape: bf16[64,128], index: 1, kind: input, shape index: {}]
  %s2 = inlined_call_operand.vmem [shape: f32[1,128], index: 2, kind: input, shape index: {}]
  %s3 = inlined_call_operand.vmem [shape: bf16[128,128], index: 3, kind: input, shape index: {}]
  %s4 = inlined_call_operand.vmem [shape: f32[1,128], index: 4, kind: input, shape index: {}]
  %s5 = inlined_call_operand.vmem [shape: bf16[128,128], index: 5, kind: input, shape index: {}]
  %s6 = inlined_call_operand.vmem [shape: f32[1,128], index: 6, kind: input, shape index: {}]
  %s7 = inlined_call_operand.vmem [shape: f32[64,128], index: 7, kind: output, shape index: {}]
  %s8 = sld [smem:[#allocation0]]
  $region61: #{template_matching_mlp_shared_embedding_forward.1} parent=0
    _
  %s10 = ssub.s32 1, %s8
  %s11 = scalar_select 0, %s10, %s8
  loop: start=0, step=1, limit=6
  $region2: #{template_matching_mlp_shared_embedding_forward.1} parent=0 // loop_pre_header
    _
  $region3: #{template_matching_mlp_shared_embedding_forward.1} parent=0 // loop_header
    %s13 = sphi 0, %s17
    %p14 = scmp.ge.s32.totalorder %s13, 6
    %s23 = sphi 0, %s25
    %s26 = sphi 0, %s23
    %s27 = sphi 0, %s26
    %s43 = sphi 0, %s27
    %s47 = sphi 0, %s47
    %s49 = sphi 0, %s47
    %s50 = sphi 0, %s49
    %s64 = sphi 0, %s50
    %s68 = sphi 0, %s68
    %s70 = sphi 0, %s68
    %s71 = sphi 0, %s70
    %s85 = sphi 0, %s71
    %s89 = sphi 0, %s89
    %s91 = sphi 0, %s89
    %s92 = sphi 0, %s91
    %s106 = sphi 0, %s92
    %s110 = sphi 0, %s110
    %s112 = sphi 0, %s110
    %s113 = sphi 0, %s112
    %s127 = sphi 0, %s113
    %s131 = sphi 0, %s131
    %s133 = sphi 0, %s131
    %s134 = sphi 0, %s133
    %s148 = sphi 0, %s134
    %s152 = sphi 0, %s152
    %s154 = sphi 0, %s152
    %s155 = sphi 0, %s154
    %s169 = sphi 0, %s155
    %s175 = sphi 0, %s177
    %s178 = sphi 0, %s175
    %s179 = sphi 0, %s178
    %s195 = sphi 0, %s179
  $region4: #{template_matching_mlp_shared_embedding_forward.1} parent=0 // loop_header_branch
    %16 = sbr.rel (%p14) target = $region8
  $region5: #{template_matching_mlp_shared_embedding_forward.1} parent=0 // loop_body
    %s18 = ssub.s32 %s13, 1
    %s19 = ssub.s32 %s13, 2
    %s20 = sadd.s32 %s13, 1
    %s21 = ssub.s32 %s13, %s20
    %p22 = scmp.eq.s32.totalorder %s21, 0
    %s24 = sadd.s32 %s23, 1
    %s25 = scalar_select %p22, %s23, %s24
    %p28 = pneg %p22
    %p29 = scmp.eq.s32.totalorder %s13, 3
    %p30 = por %p28, %p29
    %p31 = scmp.ne.s32.totalorder %s23, %s26
    %p32 = scmp.eq.s32.totalorder %s13, 0
    %p33 = por %p31, %p32
    %p34 = scmp.ne.s32.totalorder %s23, %s26
    %p35 = scmp.eq.s32.totalorder %s18, 3
    %p36 = por %p34, %p35
    %p37 = scmp.ne.s32.totalorder %s26, %s27
    %p38 = scmp.eq.s32.totalorder %s18, 0
    %p39 = por %p37, %p38
    %p40 = scmp.ne.s32.totalorder %s26, %s27
    %p41 = scmp.eq.s32.totalorder %s19, 3
    %p42 = por %p40, %p41
    %p44 = scmp.ne.s32.totalorder %s27, %s43
    %p45 = scmp.eq.s32.totalorder %s19, 0
    %p46 = por %p44, %p45
    %s48 = sadd.s32 %s47, 1
    %p51 = scmp.eq.s32.totalorder %s13, 3
    %p52 = scmp.ne.s32.totalorder %s47, %s49
    %p53 = scmp.eq.s32.totalorder %s13, 0
    %p54 = por %p52, %p53
    %p55 = scmp.ne.s32.totalorder %s47, %s49
    %p56 = scmp.eq.s32.totalorder %s18, 3
    %p57 = por %p55, %p56
    %p58 = scmp.ne.s32.totalorder %s49, %s50
    %p59 = scmp.eq.s32.totalorder %s18, 0
    %p60 = por %p58, %p59
    %p61 = scmp.ne.s32.totalorder %s49, %s50
    %p62 = scmp.eq.s32.totalorder %s19, 3
    %p63 = por %p61, %p62
    %p65 = scmp.ne.s32.totalorder %s50, %s64
    %p66 = scmp.eq.s32.totalorder %s19, 0
    %p67 = por %p65, %p66
    %s69 = sadd.s32 %s68, 1
    %p72 = scmp.eq.s32.totalorder %s13, 3
    %p73 = scmp.ne.s32.totalorder %s68, %s70
    %p74 = scmp.eq.s32.totalorder %s13, 0
    %p75 = por %p73, %p74
    %p76 = scmp.ne.s32.totalorder %s68, %s70
    %p77 = scmp.eq.s32.totalorder %s18, 3
    %p78 = por %p76, %p77
    %p79 = scmp.ne.s32.totalorder %s70, %s71
    %p80 = scmp.eq.s32.totalorder %s18, 0
    %p81 = por %p79, %p80
    %p82 = scmp.ne.s32.totalorder %s70, %s71
    %p83 = scmp.eq.s32.totalorder %s19, 3
    %p84 = por %p82, %p83
    %p86 = scmp.ne.s32.totalorder %s71, %s85
    %p87 = scmp.eq.s32.totalorder %s19, 0
    %p88 = por %p86, %p87
    %s90 = sadd.s32 %s89, 1
    %p93 = scmp.eq.s32.totalorder %s13, 3
    %p94 = scmp.ne.s32.totalorder %s89, %s91
    %p95 = scmp.eq.s32.totalorder %s13, 0
    %p96 = por %p94, %p95
    %p97 = scmp.ne.s32.totalorder %s89, %s91
    %p98 = scmp.eq.s32.totalorder %s18, 3
    %p99 = por %p97, %p98
    %p100 = scmp.ne.s32.totalorder %s91, %s92
    %p101 = scmp.eq.s32.totalorder %s18, 0
    %p102 = por %p100, %p101
    %p103 = scmp.ne.s32.totalorder %s91, %s92
    %p104 = scmp.eq.s32.totalorder %s19, 3
    %p105 = por %p103, %p104
    %p107 = scmp.ne.s32.totalorder %s92, %s106
    %p108 = scmp.eq.s32.totalorder %s19, 0
    %p109 = por %p107, %p108
    %s111 = sadd.s32 %s110, 1
    %p114 = scmp.eq.s32.totalorder %s13, 3
    %p115 = scmp.ne.s32.totalorder %s110, %s112
    %p116 = scmp.eq.s32.totalorder %s13, 0
    %p117 = por %p115, %p116
    %p118 = scmp.ne.s32.totalorder %s110, %s112
    %p119 = scmp.eq.s32.totalorder %s18, 3
    %p120 = por %p118, %p119
    %p121 = scmp.ne.s32.totalorder %s112, %s113
    %p122 = scmp.eq.s32.totalorder %s18, 0
    %p123 = por %p121, %p122
    %p124 = scmp.ne.s32.totalorder %s112, %s113
    %p125 = scmp.eq.s32.totalorder %s19, 3
    %p126 = por %p124, %p125
    %p128 = scmp.ne.s32.totalorder %s113, %s127
    %p129 = scmp.eq.s32.totalorder %s19, 0
    %p130 = por %p128, %p129
    %s132 = sadd.s32 %s131, 1
    %p135 = scmp.eq.s32.totalorder %s13, 3
    %p136 = scmp.ne.s32.totalorder %s131, %s133
    %p137 = scmp.eq.s32.totalorder %s13, 0
    %p138 = por %p136, %p137
    %p139 = scmp.ne.s32.totalorder %s131, %s133
    %p140 = scmp.eq.s32.totalorder %s18, 3
    %p141 = por %p139, %p140
    %p142 = scmp.ne.s32.totalorder %s133, %s134
    %p143 = scmp.eq.s32.totalorder %s18, 0
    %p144 = por %p142, %p143
    %p145 = scmp.ne.s32.totalorder %s133, %s134
    %p146 = scmp.eq.s32.totalorder %s19, 3
    %p147 = por %p145, %p146
    %p149 = scmp.ne.s32.totalorder %s134, %s148
    %p150 = scmp.eq.s32.totalorder %s19, 0
    %p151 = por %p149, %p150
    %s153 = sadd.s32 %s152, 1
    %p156 = scmp.eq.s32.totalorder %s13, 3
    %p157 = scmp.ne.s32.totalorder %s152, %s154
    %p158 = scmp.eq.s32.totalorder %s13, 0
    %p159 = por %p157, %p158
    %p160 = scmp.ne.s32.totalorder %s152, %s154
    %p161 = scmp.eq.s32.totalorder %s18, 3
    %p162 = por %p160, %p161
    %p163 = scmp.ne.s32.totalorder %s154, %s155
    %p164 = scmp.eq.s32.totalorder %s18, 0
    %p165 = por %p163, %p164
    %p166 = scmp.ne.s32.totalorder %s154, %s155
    %p167 = scmp.eq.s32.totalorder %s19, 3
    %p168 = por %p166, %p167
    %p170 = scmp.ne.s32.totalorder %s155, %s169
    %p171 = scmp.eq.s32.totalorder %s19, 0
    %p172 = por %p170, %p171
    %s173 = ssub.s32 %s13, %s20
    %p174 = scmp.eq.s32.totalorder %s173, 0
    %s176 = sadd.s32 %s175, 1
    %s177 = scalar_select %p174, %s175, %s176
    %p180 = pneg %p174
    %p181 = scmp.eq.s32.totalorder %s13, 3
    %p182 = por %p180, %p181
    %p183 = scmp.ne.s32.totalorder %s175, %s178
    %p184 = scmp.eq.s32.totalorder %s13, 0
    %p185 = por %p183, %p184
    %p186 = scmp.ne.s32.totalorder %s175, %s178
    %p187 = scmp.eq.s32.totalorder %s18, 3
    %p188 = por %p186, %p187
    %p189 = scmp.ne.s32.totalorder %s178, %s179
    %p190 = scmp.eq.s32.totalorder %s18, 0
    %p191 = por %p189, %p190
    %p192 = scmp.ne.s32.totalorder %s178, %s179
    %p193 = scmp.eq.s32.totalorder %s19, 3
    %p194 = por %p192, %p193
    %p196 = scmp.ne.s32.totalorder %s179, %s195
    %p197 = scmp.eq.s32.totalorder %s19, 0
    %p198 = por %p196, %p197
    %p199 = scmp.le.s32.totalorder 1, %s13
    %p200 = scmp.lt.s32.totalorder %s13, 5
    %p201 = pnand %p199, %p200
    %p202 = pneg %p201
    // Predicated region
    $region9: #{template_matching_mlp_shared_embedding_forward.1} parent=5 // pred_check
      _
    $region10: #{template_matching_mlp_shared_embedding_forward.1} parent=5 // pred_check_branch
      %204 = sbr.rel (%p201) target = $region12
    $region11: #{template_matching_mlp_shared_embedding_forward.1} parent=5 // pred_region
      %s205 = ssub.s32 %s13, 1
      // Predicated region
      $region13: #{template_matching_mlp_shared_embedding_forward.1} parent=11 // pred_check
        %p206 = pneg %p60
      $region14: #{template_matching_mlp_shared_embedding_forward.1} parent=11 // pred_check_branch
        %208 = sbr.rel (%p206) target = $region16
      $region15: #{template_matching_mlp_shared_embedding_forward.1} parent=11 // pred_region
        _
      $region16: #{template_matching_mlp_shared_embedding_forward.1} parent=11 // pred_fallthru
        _
      // Predicated region
      $region17: #{template_matching_mlp_shared_embedding_forward.1} parent=11 // pred_check
        %p209 = pneg %p81
      $region18: #{template_matching_mlp_shared_embedding_forward.1} parent=11 // pred_check_branch
        %211 = sbr.rel (%p209) target = $region20
      $region19: #{template_matching_mlp_shared_embedding_forward.1} parent=11 // pred_region
        _
      $region20: #{template_matching_mlp_shared_embedding_forward.1} parent=11 // pred_fallthru
        _
      // Predicated region
      $region21: #{template_matching_mlp_shared_embedding_forward.1} parent=11 // pred_check
        %p212 = pneg %p102
      $region22: #{template_matching_mlp_shared_embedding_forward.1} parent=11 // pred_check_branch
        %214 = sbr.rel (%p212) target = $region24
      $region23: #{template_matching_mlp_shared_embedding_forward.1} parent=11 // pred_region
        _
      $region24: #{template_matching_mlp_shared_embedding_forward.1} parent=11 // pred_fallthru
        _
      // Predicated region
      $region25: #{template_matching_mlp_shared_embedding_forward.1} parent=11 // pred_check
        %p215 = pneg %p123
      $region26: #{template_matching_mlp_shared_embedding_forward.1} parent=11 // pred_check_branch
        %217 = sbr.rel (%p215) target = $region28
      $region27: #{template_matching_mlp_shared_embedding_forward.1} parent=11 // pred_region
        _
      $region28: #{template_matching_mlp_shared_embedding_forward.1} parent=11 // pred_fallthru
        _
      // Predicated region
      $region29: #{template_matching_mlp_shared_embedding_forward.1} parent=11 // pred_check
        %p218 = pneg %p144
      $region30: #{template_matching_mlp_shared_embedding_forward.1} parent=11 // pred_check_branch
        %220 = sbr.rel (%p218) target = $region32
      $region31: #{template_matching_mlp_shared_embedding_forward.1} parent=11 // pred_region
        _
      $region32: #{template_matching_mlp_shared_embedding_forward.1} parent=11 // pred_fallthru
        _
      // Predicated region
      $region33: #{template_matching_mlp_shared_embedding_forward.1} parent=11 // pred_check
        %p221 = pneg %p165
      $region34: #{template_matching_mlp_shared_embedding_forward.1} parent=11 // pred_check_branch
        %223 = sbr.rel (%p221) target = $region36
      $region35: #{template_matching_mlp_shared_embedding_forward.1} parent=11 // pred_region
        _
      $region36: #{template_matching_mlp_shared_embedding_forward.1} parent=11 // pred_fallthru
        _
    $region12: #{template_matching_mlp_shared_embedding_forward.1} parent=5 // pred_fallthru
      _
    %p224 = scmp.lt.s32.totalorder %s13, 4
    // Predicated region
    $region37: #{template_matching_mlp_shared_embedding_forward.1} parent=5 // pred_check
      %p225 = pneg %p224
    $region38: #{template_matching_mlp_shared_embedding_forward.1} parent=5 // pred_check_branch
      %227 = sbr.rel (%p225) target = $region40
    $region39: #{template_matching_mlp_shared_embedding_forward.1} parent=5 // pred_region
      // Predicated region
      $region41: #{template_matching_mlp_shared_embedding_forward.1} parent=39 // pred_check
        %p228 = pneg %p33
      $region42: #{template_matching_mlp_shared_embedding_forward.1} parent=39 // pred_check_branch
        %230 = sbr.rel (%p228) target = $region44
      $region43: #{template_matching_mlp_shared_embedding_forward.1} parent=39 // pred_region
        %s231 = smul.u32 2, %s13
        %p232 = scmp.lt.s32.totalorder %s231, 7
        %s233 = scalar_select %p232, %s231, 7
        %s234 = smul.addr %s233, 8
        %s235 = scalar_lea.vmem %s0, %s234
        %s236 = smul.u32 2, %s13
      $region44: #{template_matching_mlp_shared_embedding_forward.1} parent=39 // pred_fallthru
        _
    $region40: #{template_matching_mlp_shared_embedding_forward.1} parent=5 // pred_fallthru
      _
    %p237 = scmp.le.s32.totalorder 1, %s13
    %p238 = scmp.lt.s32.totalorder %s13, 5
    %p239 = pnand %p237, %p238
    %p240 = pneg %p239
    // Predicated region
    $region45: #{template_matching_mlp_shared_embedding_forward.1} parent=5 // pred_check
      _
    $region46: #{template_matching_mlp_shared_embedding_forward.1} parent=5 // pred_check_branch
      %242 = sbr.rel (%p239) target = $region48
    $region47: #{template_matching_mlp_shared_embedding_forward.1} parent=5 // pred_region
      %s243 = ssub.s32 %s13, 1
      %s244 = smul.u32 2, %s18
      %p245 = scmp.lt.s32.totalorder %s244, 7
      %s246 = scalar_select %p245, %s244, 7
      %s247 = smul.addr %s246, 8
      %s248 = scalar_lea.vmem %s0, %s247
      %p249 = pneg %p39
      %p250 = pneg %p36
      %p251 = pneg %p60
      %p252 = pneg %p57
      %p253 = pneg %p81
      %p254 = pneg %p78
      %p255 = pneg %p102
      %p256 = pneg %p99
      %p257 = pneg %p123
      %p258 = pneg %p120
      %p259 = pneg %p144
      %p260 = pneg %p141
      %p261 = pneg %p165
      %p262 = pneg %p162
      %p263 = pneg %p191
      %p264 = pneg %p188
      %s265 = smul.u32 2, %s18
      %p266 = scmp.lt.s32.totalorder %s265, 7
      %s267 = scalar_select %p266, %s265, 7
      %s268 = smul.addr %s267, 8
      %s269 = scalar_lea.vmem %s7, %s268
      %s270 = smul.u32 2, %s18
      %p271 = scmp.lt.s32.totalorder %s270, 7
      %s272 = scalar_select %p271, %s270, 7
      %s273 = smul.addr %s272, 8
      %s274 = scalar_lea.vmem %s0, %s273
      %s275 = smul.u32 2, %s18
      %s276 = smul.u32 2, %s18
      %p277 = scmp.lt.s32.totalorder %s276, 7
      %s278 = scalar_select %p277, %s276, 7
      %s279 = smul.addr %s278, 8
      %s280 = scalar_lea.vmem %s7, %s279
      %s281 = smul.u32 2, %s18
      %v283 = vld [vmem:[%s274] sm:$0xff]
      %v284 = vld [vmem:[%s274 + $0x8] sm:$0xff]
      %v285 = vlaneseq
      %v286 = vand.u32 %v285, 127
      %v287 = vmul.u32 %v286, 8
      %v288 = vadd.s32 %v283, %v287
      %v289 = vadd.s32 %v284, %v287
      %290 = vset.pattern.permute.xlu0 0
      %291 = vperm.xlu0 %290, %v288
      %v292 = vpop.permute.xlu0 %291
      %293 = vset.pattern.permute.xlu0 0
      %294 = vperm.xlu0 %293, %v289
      %v295 = vpop.permute.xlu0 %294
      %vm296 = vcmp.eq.s32.totalorder %v286, %v292
      %vm297 = vcmp.eq.s32.totalorder %v286, %v295
      %v298 = vsel %vm296, 1, 0
      %v299 = vsel %vm297, 1, 0
      %v300 = vcvt.s32.f32 %v298
      %v301 = vcvt.s32.f32 %v299
      %v302 = vadd.f32 %v300, 0.0
      %v303 = vadd.f32 %v301, 0.0
      %304 = vset.pattern.permute.xlu0 1
      %305 = vperm.xlu0 %304, %v288
      %v306 = vpop.permute.xlu0 %305
      %307 = vset.pattern.permute.xlu0 1
      %308 = vperm.xlu0 %307, %v289
      %v309 = vpop.permute.xlu0 %308
      %vm310 = vcmp.eq.s32.totalorder %v286, %v306
      %vm311 = vcmp.eq.s32.totalorder %v286, %v309
      %v312 = vsel %vm310, 1, 0
      %v313 = vsel %vm311, 1, 0
      %v314 = vcvt.s32.f32 %v312
      %v315 = vcvt.s32.f32 %v313
      %v316 = vadd.f32 %v302, %v314
      %v317 = vadd.f32 %v303, %v315
      %318 = vset.pattern.permute.xlu0 2
      %319 = vperm.xlu0 %318, %v288
      %v320 = vpop.permute.xlu0 %319
      %321 = vset.pattern.permute.xlu0 2
      %322 = vperm.xlu0 %321, %v289
      %v323 = vpop.permute.xlu0 %322
      %vm324 = vcmp.eq.s32.totalorder %v286, %v320
      %vm325 = vcmp.eq.s32.totalorder %v286, %v323
      %v326 = vsel %vm324, 1, 0
      %v327 = vsel %vm325, 1, 0
      %v328 = vcvt.s32.f32 %v326
      %v329 = vcvt.s32.f32 %v327
      %v330 = vadd.f32 %v316, %v328
      %v331 = vadd.f32 %v317, %v329
      %332 = vset.pattern.permute.xlu0 3
      %333 = vperm.xlu0 %332, %v288
      %v334 = vpop.permute.xlu0 %333
      %335 = vset.pattern.permute.xlu0 3
      %336 = vperm.xlu0 %335, %v289
      %v337 = vpop.permute.xlu0 %336
      %vm338 = vcmp.eq.s32.totalorder %v286, %v334
      %vm339 = vcmp.eq.s32.totalorder %v286, %v337
      %v340 = vsel %vm338, 1, 0
      %v341 = vsel %vm339, 1, 0
      %v342 = vcvt.s32.f32 %v340
      %v343 = vcvt.s32.f32 %v341
      %v344 = vadd.f32 %v330, %v342
      %v345 = vadd.f32 %v331, %v343
      %346 = vset.pattern.permute.xlu0 4
      %347 = vperm.xlu0 %346, %v288
      %v348 = vpop.permute.xlu0 %347
      %349 = vset.pattern.permute.xlu0 4
      %350 = vperm.xlu0 %349, %v289
      %v351 = vpop.permute.xlu0 %350
      %vm352 = vcmp.eq.s32.totalorder %v286, %v348
      %vm353 = vcmp.eq.s32.totalorder %v286, %v351
      %v354 = vsel %vm352, 1, 0
      %v355 = vsel %vm353, 1, 0
      %v356 = vcvt.s32.f32 %v354
      %v357 = vcvt.s32.f32 %v355
      %v358 = vadd.f32 %v344, %v356
      %v359 = vadd.f32 %v345, %v357
      %360 = vset.pattern.permute.xlu0 5
      %361 = vperm.xlu0 %360, %v288
      %v362 = vpop.permute.xlu0 %361
      %363 = vset.pattern.permute.xlu0 5
      %364 = vperm.xlu0 %363, %v289
      %v365 = vpop.permute.xlu0 %364
      %vm366 = vcmp.eq.s32.totalorder %v286, %v362
      %vm367 = vcmp.eq.s32.totalorder %v286, %v365
      %v368 = vsel %vm366, 1, 0
      %v369 = vsel %vm367, 1, 0
      %v370 = vcvt.s32.f32 %v368
      %v371 = vcvt.s32.f32 %v369
      %v372 = vadd.f32 %v358, %v370
      %v373 = vadd.f32 %v359, %v371
      %374 = vset.pattern.permute.xlu0 6
      %375 = vperm.xlu0 %374, %v288
      %v376 = vpop.permute.xlu0 %375
      %377 = vset.pattern.permute.xlu0 6
      %378 = vperm.xlu0 %377, %v289
      %v379 = vpop.permute.xlu0 %378
      %vm380 = vcmp.eq.s32.totalorder %v286, %v376
      %vm381 = vcmp.eq.s32.totalorder %v286, %v379
      %v382 = vsel %vm380, 1, 0
      %v383 = vsel %vm381, 1, 0
      %v384 = vcvt.s32.f32 %v382
      %v385 = vcvt.s32.f32 %v383
      %v386 = vadd.f32 %v372, %v384
      %v387 = vadd.f32 %v373, %v385
      %388 = vset.pattern.permute.xlu0 7
      %389 = vperm.xlu0 %388, %v288
      %v390 = vpop.permute.xlu0 %389
      %391 = vset.pattern.permute.xlu0 7
      %392 = vperm.xlu0 %391, %v289
      %v393 = vpop.permute.xlu0 %392
      %vm394 = vcmp.eq.s32.totalorder %v286, %v390
      %vm395 = vcmp.eq.s32.totalorder %v286, %v393
      %v396 = vsel %vm394, 1, 0
      %v397 = vsel %vm395, 1, 0
      %v398 = vcvt.s32.f32 %v396
      %v399 = vcvt.s32.f32 %v397
      %v400 = vadd.f32 %v386, %v398
      %v401 = vadd.f32 %v387, %v399
      %v402 = vpack.c.bf16 %v401, %v400
      %v403 = vld [vmem:[%s1] sm:$0xf]
      %v404 = vld [vmem:[%s1 + $0x4] sm:$0xf]
      %v405 = vld [vmem:[%s1 + $0x8] sm:$0xf]
      %v406 = vld [vmem:[%s1 + $0xc] sm:$0xf]
      %v407 = vld [vmem:[%s1 + $0x10] sm:$0xf]
      %v408 = vld [vmem:[%s1 + $0x14] sm:$0xf]
      %v409 = vld [vmem:[%s1 + $0x18] sm:$0xf]
      %v410 = vld [vmem:[%s1 + $0x1c] sm:$0xf]
      %v411 = vld [vmem:[%s2] sm:$0x1]
      %v413 = vlaneseq
      %v414 = vshrl.u32 %v413, 7
      %v415 = vsub.s32 0, %v414
      %v416 = vrot.slane %v411, %v415
      %v426 = vunpack.c.l.b16 %v403
      %v427 = vunpack.c.l.b16 %v404
      %v428 = vunpack.c.l.b16 %v405
      %v429 = vunpack.c.l.b16 %v406
      %v430 = vunpack.c.l.b16 %v407
      %v431 = vunpack.c.l.b16 %v408
      %v432 = vunpack.c.l.b16 %v409
      %v433 = vunpack.c.l.b16 %v410
      %v434 = vpack.c.b16 %v427, %v426
      %v435 = vpack.c.b16 %v429, %v428
      %v436 = vpack.c.b16 %v431, %v430
      %v437 = vpack.c.b16 %v433, %v432
      %vm442 = vcmask 523264
      %v444 = vsel %vm442, %v402, 0
      %446 = vmatprep.subr.bf16.mxu0 0
      %447 = vmatpush1.bf16.msra.mxu0 %v434
      %448 = vmatprep.subr.bf16.mxu0 0
      %449 = vmatpush1.bf16.msra.mxu0 %v435
      %450 = vmatprep.subr.bf16.mxu0 0
      %451 = vmatpush1.bf16.msra.mxu0 %v436
      %452 = vmatprep.subr.bf16.mxu0 0
      %453 = vmatpush1.bf16.msra.mxu0 %v437
      %454 = vmatprep.subr.bf16.mxu0 0
      %455 = vmatpush1.bf16.msra.mxu0 0
      %456 = vmatprep.subr.bf16.mxu0 0
      %457 = vmatpush1.bf16.msra.mxu0 0
      %458 = vmatprep.subr.bf16.mxu0 0
      %459 = vmatpush1.bf16.msra.mxu0 0
      %460 = vmatprep.subr.bf16.mxu0 0
      %461 = vmatpush1.bf16.msra.mxu0 0
      %462 = vmatprep.subr.bf16.mxu0 0
      %463 = vmatpush1.bf16.msra.mxu0 0
      %464 = vmatprep.subr.bf16.mxu0 0
      %465 = vmatpush1.bf16.msra.mxu0 0
      %466 = vmatprep.subr.bf16.mxu0 0
      %467 = vmatpush1.bf16.msra.mxu0 0
      %468 = vmatprep.subr.bf16.mxu0 0
      %469 = vmatpush1.bf16.msra.mxu0 0
      %470 = vmatprep.subr.bf16.mxu0 0
      %471 = vmatpush1.bf16.msra.mxu0 0
      %472 = vmatprep.subr.bf16.mxu0 0
      %473 = vmatpush1.bf16.msra.mxu0 0
      %474 = vmatprep.subr.bf16.mxu0 0
      %475 = vmatpush1.bf16.msra.mxu0 0
      %476 = vmatprep.subr.bf16.mxu0 0
      %477 = vmatpush1.bf16.msra.mxu0 0
      %478 = vmatprep.mubr.bf16.mxu0 0
      %479 = vmatmul.mubr.bf16.gmra.mrb[0].mxu0 %v444
      %v480 = vpop.f32.mrb[0].mxu0
      %v481 = vadd.f32 %v416, %v480
      %v482 = vpop.f32.mrb[0].mxu0
      %v483 = vpop.f32.mrb[0].mxu0
      %v484 = vadd.f32 %v416, %v483
      %v485 = vpop.f32.mrb[0].mxu0
      %486 = vdwg.mxu0
      %v487 = vmax.f32 %v481, 0.0
      %v488 = vmax.f32 %v484, 0.0
      %v489 = vld [vmem:[%s3] sm:$0xf]
      %v490 = vld [vmem:[%s3 + $0x4] sm:$0xf]
      %v491 = vld [vmem:[%s3 + $0x8] sm:$0xf]
      %v492 = vld [vmem:[%s3 + $0xc] sm:$0xf]
      %v493 = vld [vmem:[%s3 + $0x10] sm:$0xf]
      %v494 = vld [vmem:[%s3 + $0x14] sm:$0xf]
      %v495 = vld [vmem:[%s3 + $0x18] sm:$0xf]
      %v496 = vld [vmem:[%s3 + $0x1c] sm:$0xf]
      %v497 = vld [vmem:[%s3 + $0x20] sm:$0xf]
      %v498 = vld [vmem:[%s3 + $0x24] sm:$0xf]
      %v499 = vld [vmem:[%s3 + $0x28] sm:$0xf]
      %v500 = vld [vmem:[%s3 + $0x2c] sm:$0xf]
      %v501 = vld [vmem:[%s3 + $0x30] sm:$0xf]
      %v502 = vld [vmem:[%s3 + $0x34] sm:$0xf]
      %v503 = vld [vmem:[%s3 + $0x38] sm:$0xf]
      %v504 = vld [vmem:[%s3 + $0x3c] sm:$0xf]
      %v505 = vld [vmem:[%s4] sm:$0x1]
      %v506 = vpack.c.bf16 %v488, %v487
      %v508 = vlaneseq
      %v509 = vshrl.u32 %v508, 7
      %v510 = vsub.s32 0, %v509
      %v511 = vrot.slane %v505, %v510
      %v529 = vunpack.c.l.b16 %v489
      %v530 = vunpack.c.l.b16 %v490
      %v531 = vunpack.c.l.b16 %v491
      %v532 = vunpack.c.l.b16 %v492
      %v533 = vunpack.c.l.b16 %v493
      %v534 = vunpack.c.l.b16 %v494
      %v535 = vunpack.c.l.b16 %v495
      %v536 = vunpack.c.l.b16 %v496
      %v537 = vunpack.c.l.b16 %v497
      %v538 = vunpack.c.l.b16 %v498
      %v539 = vunpack.c.l.b16 %v499
      %v540 = vunpack.c.l.b16 %v500
      %v541 = vunpack.c.l.b16 %v501
      %v542 = vunpack.c.l.b16 %v502
      %v543 = vunpack.c.l.b16 %v503
      %v544 = vunpack.c.l.b16 %v504
      %v545 = vpack.c.b16 %v530, %v529
      %v546 = vpack.c.b16 %v532, %v531
      %v547 = vpack.c.b16 %v534, %v533
      %v548 = vpack.c.b16 %v536, %v535
      %v549 = vpack.c.b16 %v538, %v537
      %v550 = vpack.c.b16 %v540, %v539
      %v551 = vpack.c.b16 %v542, %v541
      %v552 = vpack.c.b16 %v544, %v543
      %561 = vmatprep.subr.bf16.mxu0 0
      %562 = vmatpush1.bf16.msra.mxu0 %v545
      %563 = vmatprep.subr.bf16.mxu0 0
      %564 = vmatpush1.bf16.msra.mxu0 %v546
      %565 = vmatprep.subr.bf16.mxu0 0
      %566 = vmatpush1.bf16.msra.mxu0 %v547
      %567 = vmatprep.subr.bf16.mxu0 0
      %568 = vmatpush1.bf16.msra.mxu0 %v548
      %569 = vmatprep.subr.bf16.mxu0 0
      %570 = vmatpush1.bf16.msra.mxu0 %v549
      %571 = vmatprep.subr.bf16.mxu0 0
      %572 = vmatpush1.bf16.msra.mxu0 %v550
      %573 = vmatprep.subr.bf16.mxu0 0
      %574 = vmatpush1.bf16.msra.mxu0 %v551
      %575 = vmatprep.subr.bf16.mxu0 0
      %576 = vmatpush1.bf16.msra.mxu0 %v552
      %577 = vmatprep.subr.bf16.mxu0 0
      %578 = vmatpush1.bf16.msra.mxu0 0
      %579 = vmatprep.subr.bf16.mxu0 0
      %580 = vmatpush1.bf16.msra.mxu0 0
      %581 = vmatprep.subr.bf16.mxu0 0
      %582 = vmatpush1.bf16.msra.mxu0 0
      %583 = vmatprep.subr.bf16.mxu0 0
      %584 = vmatpush1.bf16.msra.mxu0 0
      %585 = vmatprep.subr.bf16.mxu0 0
      %586 = vmatpush1.bf16.msra.mxu0 0
      %587 = vmatprep.subr.bf16.mxu0 0
      %588 = vmatpush1.bf16.msra.mxu0 0
      %589 = vmatprep.subr.bf16.mxu0 0
      %590 = vmatpush1.bf16.msra.mxu0 0
      %591 = vmatprep.subr.bf16.mxu0 0
      %592 = vmatpush1.bf16.msra.mxu0 0
      %593 = vmatprep.mubr.bf16.mxu0 0
      %594 = vmatmul.mubr.bf16.gmra.mrb[0].mxu0 %v506
      %v595 = vpop.f32.mrb[0].mxu0
      %v596 = vadd.f32 %v511, %v595
      %v597 = vpop.f32.mrb[0].mxu0
      %v598 = vpop.f32.mrb[0].mxu0
      %v599 = vadd.f32 %v511, %v598
      %v600 = vpop.f32.mrb[0].mxu0
      %601 = vdwg.mxu0
      %v602 = vmax.f32 %v596, 0.0
      %v603 = vmax.f32 %v599, 0.0
      %v604 = vld [vmem:[%s5] sm:$0xf]
      %v605 = vld [vmem:[%s5 + $0x4] sm:$0xf]
      %v606 = vld [vmem:[%s5 + $0x8] sm:$0xf]
      %v607 = vld [vmem:[%s5 + $0xc] sm:$0xf]
      %v608 = vld [vmem:[%s5 + $0x10] sm:$0xf]
      %v609 = vld [vmem:[%s5 + $0x14] sm:$0xf]
      %v610 = vld [vmem:[%s5 + $0x18] sm:$0xf]
      %v611 = vld [vmem:[%s5 + $0x1c] sm:$0xf]
      %v612 = vld [vmem:[%s5 + $0x20] sm:$0xf]
      %v613 = vld [vmem:[%s5 + $0x24] sm:$0xf]
      %v614 = vld [vmem:[%s5 + $0x28] sm:$0xf]
      %v615 = vld [vmem:[%s5 + $0x2c] sm:$0xf]
      %v616 = vld [vmem:[%s5 + $0x30] sm:$0xf]
      %v617 = vld [vmem:[%s5 + $0x34] sm:$0xf]
      %v618 = vld [vmem:[%s5 + $0x38] sm:$0xf]
      %v619 = vld [vmem:[%s5 + $0x3c] sm:$0xf]
      %v620 = vld [vmem:[%s6] sm:$0x1]
      %v621 = vpack.c.bf16 %v603, %v602
      %v623 = vlaneseq
      %v624 = vshrl.u32 %v623, 7
      %v625 = vsub.s32 0, %v624
      %v626 = vrot.slane %v620, %v625
      %v644 = vunpack.c.l.b16 %v604
      %v645 = vunpack.c.l.b16 %v605
      %v646 = vunpack.c.l.b16 %v606
      %v647 = vunpack.c.l.b16 %v607
      %v648 = vunpack.c.l.b16 %v608
      %v649 = vunpack.c.l.b16 %v609
      %v650 = vunpack.c.l.b16 %v610
      %v651 = vunpack.c.l.b16 %v611
      %v652 = vunpack.c.l.b16 %v612
      %v653 = vunpack.c.l.b16 %v613
      %v654 = vunpack.c.l.b16 %v614
      %v655 = vunpack.c.l.b16 %v615
      %v656 = vunpack.c.l.b16 %v616
      %v657 = vunpack.c.l.b16 %v617
      %v658 = vunpack.c.l.b16 %v618
      %v659 = vunpack.c.l.b16 %v619
      %v660 = vpack.c.b16 %v645, %v644
      %v661 = vpack.c.b16 %v647, %v646
      %v662 = vpack.c.b16 %v649, %v648
      %v663 = vpack.c.b16 %v651, %v650
      %v664 = vpack.c.b16 %v653, %v652
      %v665 = vpack.c.b16 %v655, %v654
      %v666 = vpack.c.b16 %v657, %v656
      %v667 = vpack.c.b16 %v659, %v658
      %676 = vmatprep.subr.bf16.mxu0 0
      %677 = vmatpush1.bf16.msra.mxu0 %v660
      %678 = vmatprep.subr.bf16.mxu0 0
      %679 = vmatpush1.bf16.msra.mxu0 %v661
      %680 = vmatprep.subr.bf16.mxu0 0
      %681 = vmatpush1.bf16.msra.mxu0 %v662
      %682 = vmatprep.subr.bf16.mxu0 0
      %683 = vmatpush1.bf16.msra.mxu0 %v663
      %684 = vmatprep.subr.bf16.mxu0 0
      %685 = vmatpush1.bf16.msra.mxu0 %v664
      %686 = vmatprep.subr.bf16.mxu0 0
      %687 = vmatpush1.bf16.msra.mxu0 %v665
      %688 = vmatprep.subr.bf16.mxu0 0
      %689 = vmatpush1.bf16.msra.mxu0 %v666
      %690 = vmatprep.subr.bf16.mxu0 0
      %691 = vmatpush1.bf16.msra.mxu0 %v667
      %692 = vmatprep.subr.bf16.mxu0 0
      %693 = vmatpush1.bf16.msra.mxu0 0
      %694 = vmatprep.subr.bf16.mxu0 0
      %695 = vmatpush1.bf16.msra.mxu0 0
      %696 = vmatprep.subr.bf16.mxu0 0
      %697 = vmatpush1.bf16.msra.mxu0 0
      %698 = vmatprep.subr.bf16.mxu0 0
      %699 = vmatpush1.bf16.msra.mxu0 0
      %700 = vmatprep.subr.bf16.mxu0 0
      %701 = vmatpush1.bf16.msra.mxu0 0
      %702 = vmatprep.subr.bf16.mxu0 0
      %703 = vmatpush1.bf16.msra.mxu0 0
      %704 = vmatprep.subr.bf16.mxu0 0
      %705 = vmatpush1.bf16.msra.mxu0 0
      %706 = vmatprep.subr.bf16.mxu0 0
      %707 = vmatpush1.bf16.msra.mxu0 0
      %708 = vmatprep.mubr.bf16.mxu0 0
      %709 = vmatmul.mubr.bf16.gmra.mrb[0].mxu0 %v621
      %v710 = vpop.f32.mrb[0].mxu0
      %v711 = vadd.f32 %v626, %v710
      %v712 = vpop.f32.mrb[0].mxu0
      %v713 = vpop.f32.mrb[0].mxu0
      %v714 = vadd.f32 %v626, %v713
      %v715 = vpop.f32.mrb[0].mxu0
      %716 = vdwg.mxu0
      %717 = vst [vmem:[%s280] sm:$0xff] %v711
      %718 = vst [vmem:[%s280 + $0x8] sm:$0xff] %v714
      %s719 = smul.u32 2, %s18
      %p720 = scmp.lt.s32.totalorder %s719, 7
      %s721 = scalar_select %p720, %s719, 7
      %s722 = smul.addr %s721, 8
      %s723 = scalar_lea.vmem %s7, %s722
      // Predicated region
      $region49: #{template_matching_mlp_shared_embedding_forward.1} parent=47 // pred_check
        %p724 = pneg %p188
      $region50: #{template_matching_mlp_shared_embedding_forward.1} parent=47 // pred_check_branch
        %726 = sbr.rel (%p724) target = $region52
      $region51: #{template_matching_mlp_shared_embedding_forward.1} parent=47 // pred_region
        %s727 = smul.u32 2, %s18
      $region52: #{template_matching_mlp_shared_embedding_forward.1} parent=47 // pred_fallthru
        _
    $region48: #{template_matching_mlp_shared_embedding_forward.1} parent=5 // pred_fallthru
      _
    %p728 = scmp.le.s32.totalorder 2, %s13
    // Predicated region
    $region53: #{template_matching_mlp_shared_embedding_forward.1} parent=5 // pred_check
      %p729 = pneg %p728
    $region54: #{template_matching_mlp_shared_embedding_forward.1} parent=5 // pred_check_branch
      %731 = sbr.rel (%p729) target = $region56
    $region55: #{template_matching_mlp_shared_embedding_forward.1} parent=5 // pred_region
      %s732 = ssub.s32 %s13, 2
      // Predicated region
      $region57: #{template_matching_mlp_shared_embedding_forward.1} parent=55 // pred_check
        %p733 = pneg %p194
      $region58: #{template_matching_mlp_shared_embedding_forward.1} parent=55 // pred_check_branch
        %735 = sbr.rel (%p733) target = $region60
      $region59: #{template_matching_mlp_shared_embedding_forward.1} parent=55 // pred_region
        %s736 = smul.u32 2, %s19
        %p737 = scmp.lt.s32.totalorder %s736, 7
        %s738 = scalar_select %p737, %s736, 7
        %s739 = smul.addr %s738, 8
        %s740 = scalar_lea.vmem %s7, %s739
      $region60: #{template_matching_mlp_shared_embedding_forward.1} parent=55 // pred_fallthru
        _
    $region56: #{template_matching_mlp_shared_embedding_forward.1} parent=5 // pred_fallthru
      _
  $region6: #{template_matching_mlp_shared_embedding_forward.1} parent=0 // loop_footer
    %s17 = sadd.s32 1, %s13
  $region7: #{template_matching_mlp_shared_embedding_forward.1} parent=0 // loop_footer_branch
    %12 = sbr.rel target = $region3
  $region8: #{template_matching_mlp_shared_embedding_forward.1} parent=0 // loop_exit
    _

</llo_original>
